<compile_context>
chip_gen: v6e
topology: v6e:2x2x1
jax: 0.10.0
libtpu: 0.0.40
codegen_flags: <defaults>
</compile_context>

<pallas_src>
import jax
import jax.numpy as jnp
from jax.experimental import pallas as pl
from jax.experimental.pallas import tpu as pltpu


def _waveact_kernel(w_ref, x_ref, o_ref):
    # w_ref: SMEM (2,) f32 -> R = w_ref[0], phi = w_ref[1]
    # o = R * sin(x + phi)  ==  w1*sin(x) + w2*cos(x)
    R = w_ref[0]
    phi = w_ref[1]
    x = x_ref[...].astype(jnp.float32)
    o_ref[...] = (R * jnp.sin(x + phi)).astype(o_ref.dtype)


def waveact_pallas(x, w1, w2, *, tile_rows=2048, lanes=128):
    """Elementwise WaveAct: w1*sin(x) + w2*cos(x), any input shape/dtype."""
    orig_shape = x.shape
    orig_dtype = x.dtype
    n = x.size

    # Scalar precompute in f32 (stays f32 in SMEM — no bf16 precision loss).
    w1f = jnp.asarray(w1, jnp.float32).reshape(())
    w2f = jnp.asarray(w2, jnp.float32).reshape(())
    R = jnp.sqrt(w1f * w1f + w2f * w2f)
    phi = jnp.arctan2(w2f, w1f)
    w = jnp.stack([R, phi])  # (2,) f32

    x_flat = jnp.reshape(x, (-1,))
    n_main = (n // lanes) * lanes          # lane-aligned bulk (no pad copy)
    rows = n_main // lanes

    pieces = []
    if rows > 0:
        x2d = jnp.reshape(x_flat[:n_main], (rows, lanes))

        if rows <= tile_rows:
            # Single block equal to the full array dim (no 8-divisibility needed).
            block_rows = rows
            grid = (1,)
        else:
            # tile_rows is a multiple of 8; a partial last block is auto-masked.
            block_rows = tile_rows
            grid = (pl.cdiv(rows, tile_rows),)

        itemsize = jnp.dtype(orig_dtype).itemsize
        cost = pl.CostEstimate(
            flops=5 * n_main,
            transcendentals=n_main,
            bytes_accessed=2 * n_main * itemsize,
        )

        out2d = pl.pallas_call(
            _waveact_kernel,
            out_shape=jax.ShapeDtypeStruct((rows, lanes), orig_dtype),
            grid_spec=pltpu.PrefetchScalarGridSpec(
                num_scalar_prefetch=0,
                grid=grid,
                in_specs=[
                    pl.BlockSpec(memory_space=pltpu.SMEM),            # (R, phi)
                    pl.BlockSpec((block_rows, lanes), lambda i: (i, 0)),
                ],
                out_specs=pl.BlockSpec((block_rows, lanes), lambda i: (i, 0)),
            ),
            compiler_params=pltpu.CompilerParams(
                dimension_semantics=("parallel",)),
            cost_estimate=cost,
        )(w, x2d)
        pieces.append(jnp.reshape(out2d, (-1,)))

    if n_main < n:
        # <128-element tail: handled in plain JAX instead of padding the array.
        tail = x_flat[n_main:].astype(jnp.float32)
        pieces.append((R * jnp.sin(tail + phi)).astype(orig_dtype))

    out_flat = pieces[0] if len(pieces) == 1 else jnp.concatenate(pieces)
    return jnp.reshape(out_flat, orig_shape)


if __name__ == "__main__":
    key = jax.random.PRNGKey(0)
    # NCHW example input; WaveAct is applied purely elementwise.
    x = jax.random.normal(key, (2, 4, 16, 16), dtype=jnp.float32)

    # Deterministic parameter init, matching nn.Parameter(torch.ones(1)).
    w1 = jnp.ones((1,), dtype=jnp.float32)
    w2 = jnp.ones((1,), dtype=jnp.float32)

    out = jax.block_until_ready(waveact_pallas(x, w1, w2))

    # Reference check (plain JAX, original two-transcendental form).
    ref = w1[0] * jnp.sin(x) + w2[0] * jnp.cos(x)
    assert out.shape == x.shape and out.dtype == x.dtype
    assert jnp.allclose(out, ref, atol=1e-5, rtol=1e-5)

    print("KERNEL_OK")
</pallas_src>

<mosaic_0001>
module attributes {stable_mosaic.version = 11 : i64} {
  func.func @_waveact_kernel(%arg0: i32, %arg1: memref<2xf32, #tpu.memory_space<smem>>, %arg2: memref<16x128xf32, #tpu.memory_space<vmem>>, %arg3: memref<16x128xf32, #tpu.memory_space<vmem>>) attributes {dimension_semantics = [#tpu.dimension_semantics<parallel>], iteration_bounds = array<i64: 1>, scalar_prefetch = 0 : i64, scratch_operands = 0 : i64, tpu.core_type = #tpu.core_type<tc>, window_params = [{transform_indices = @transform_0, window_bounds = array<i64: 2>}, {transform_indices = @transform_1, window_bounds = array<i64: 16, 128>}, {transform_indices = @transform_2, window_bounds = array<i64: 16, 128>}]} {
    %c0 = arith.constant 0 : index
    %0 = memref.load %arg1[%c0] : memref<2xf32, #tpu.memory_space<smem>>
    %c1 = arith.constant 1 : index
    %1 = memref.load %arg1[%c1] : memref<2xf32, #tpu.memory_space<smem>>
    %c0_0 = arith.constant 0 : index
    %c0_1 = arith.constant 0 : index
    %2 = vector.load %arg2[%c0_0, %c0_1] : memref<16x128xf32, #tpu.memory_space<vmem>>, vector<16x128xf32>
    %3 = vector.broadcast %1 : f32 to vector<16x128xf32>
    %4 = arith.addf %2, %3 : vector<16x128xf32>
    %5 = math.sin %4 : vector<16x128xf32>
    %6 = vector.broadcast %0 : f32 to vector<16x128xf32>
    %7 = arith.mulf %6, %5 : vector<16x128xf32>
    %c0_2 = arith.constant 0 : index
    %c0_3 = arith.constant 0 : index
    %8 = vector.load %arg3[%c0_2, %c0_3] : memref<16x128xf32, #tpu.memory_space<vmem>>, vector<16x128xf32>
    tpu.vector_store %arg3[%c0_2, %c0_3], %7 {strides = array<i32>} : memref<16x128xf32, #tpu.memory_space<vmem>>, vector<16x128xf32>,
    return
  }
  func.func @transform_0(%arg0: i32) -> i32 {
    %c0_i32 = arith.constant 0 : i32
    %c0_i32_0 = arith.constant 0 : i32
    return %c0_i32 : i32
  }
  func.func @transform_1(%arg0: i32) -> (i32, i32) {
    %c0_i32 = arith.constant 0 : i32
    %c0_i32_0 = arith.constant 0 : i32
    return %arg0, %c0_i32 : i32, i32
  }
  func.func @transform_2(%arg0: i32) -> (i32, i32) {
    %c0_i32 = arith.constant 0 : i32
    %c0_i32_0 = arith.constant 0 : i32
    return %arg0, %c0_i32 : i32, i32
  }
}

</mosaic_0001>

<llo_original>
// kernel: tpu_custom_call.1
$region0: #{tpu_custom_call.1}
  #allocation0 [shape = 'u32[]', space=smem, size = 0x4, offset = 0x4, fixed_abs, tag = 'smem constant byte address 0x4 - core index']
  #allocation1 [shape = 'u32[144,128]{1,0:T(1,128)}', space=vmem, size = 0x12000, scoped, tag = 'internal scratch']
  %s0 = inlined_call_operand.hbm [shape: f32[2], index: 0, kind: input, shape index: {}]
  %s1 = inlined_call_operand.hbm [shape: f32[16,128], index: 1, kind: input, shape index: {}]
  %s2 = inlined_call_operand.hbm [shape: f32[16,128], index: 2, kind: output, shape index: {}]
  %s3 = sld [smem:[#allocation0]]
  $region26: #{tpu_custom_call.1} parent=0
    _
  %s5 = ssub.s32 1, %s3
  %s6 = scalar_select 0, %s5, %s3
  $region1: #{tpu_custom_call.1} parent=0
    #allocation2 [shape = 'u8[512]{0}', space=smem, size = 0x200, scoped, tag = 'input window, operand 0, single buffered']
    #allocation3 [shape = 's32[1]{0}', space=sflag, size = 0x4, scoped, tag = 'scoped memory for tpu_custom_call.1']
    #allocation4 [shape = 's32[1]{0}', space=sflag, size = 0x4, scoped, tag = 'scoped memory for tpu_custom_call.1']
    #allocation5 [shape = 's32[1]{0}', space=sflag, size = 0x4, scoped, tag = 'scoped memory for tpu_custom_call.1']
    #allocation6 [shape = 'u8[8192]{0}', space=vmem, size = 0x2000, scoped, tag = 'input window, operand 1, single buffered']
    #allocation7 [shape = 'u8[8192]{0}', space=vmem, size = 0x2000, scoped, tag = 'output window, operand 0, single buffered']
    %7 = vsyncpa [#allocation5], 0
    %8 = vsyncpa [#allocation3], 0
    %9 = vsyncpa [#allocation4], 0
    // Predicated region
    $region2: #{tpu_custom_call.1} parent=1 // pred_check
      _
    $region3: #{tpu_custom_call.1} parent=1 // pred_check_branch
      %11 = sbr.rel (0) target = $region5
    $region4: #{tpu_custom_call.1} parent=1 // pred_region
      %s13 = ssub.s32 16, 16
      %14 = vsyncadd [#allocation5], %s13
      %17 = dma.hbm_to_smem %s0, 16, [#allocation2], [#allocation5]
    $region5: #{tpu_custom_call.1} parent=1 // pred_fallthru
      _
    // Predicated region
    $region6: #{tpu_custom_call.1} parent=1 // pred_check
      _
    $region7: #{tpu_custom_call.1} parent=1 // pred_check_branch
      %19 = sbr.rel (0) target = $region9
    $region8: #{tpu_custom_call.1} parent=1 // pred_region
      %s21 = ssub.s32 256, 256
      %22 = vsyncadd [#allocation3], %s21
      %s23 = sshll.u32 [#allocation6], 4
      %s24 = int_to_ptr.vmem [resolvable:$true] %s23
      %29 = dma.hbm_to_vmem [thread:$0]  %s1, 256, %s24, [#allocation3], 128, 128, 8
    $region9: #{tpu_custom_call.1} parent=1 // pred_fallthru
      _
    // Predicated region
    $region10: #{tpu_custom_call.1} parent=1 // pred_check
      _
    $region11: #{tpu_custom_call.1} parent=1 // pred_check_branch
      %31 = sbr.rel (0) target = $region13
    $region12: #{tpu_custom_call.1} parent=1 // pred_region
      %32 = dma.done [#allocation5], 16
    $region13: #{tpu_custom_call.1} parent=1 // pred_fallthru
      _
    // Predicated region
    $region14: #{tpu_custom_call.1} parent=1 // pred_check
      _
    $region15: #{tpu_custom_call.1} parent=1 // pred_check_branch
      %34 = sbr.rel (0) target = $region17
    $region16: #{tpu_custom_call.1} parent=1 // pred_region
      %35 = dma.done [#allocation3], 256
    $region17: #{tpu_custom_call.1} parent=1 // pred_fallthru
      _
    %36 = sfence
    %s37 = sld [smem:[#allocation2]]
    %s38 = sld [smem:[#allocation2 + $0x1]]
    %v39 = vld [vmem:[#allocation6] sm:$0xff]
    %v40 = vld [vmem:[#allocation6 + $0x8] sm:$0xff]
    %v41 = vstv %s38
    %v42 = vadd.f32 %v39, %v41
    %v43 = vadd.f32 %v40, %v41
    %v44 = vand.u32 2147483647, %v42
    %vm45 = vcmp.le.f32.partialorder %v44, 0.7853982
    %vm46 = vcmp.lt.s32.totalorder %v42, 0
    %v47 = vand.u32 %v42, 2139095040
    %v48 = vshrl.u32 %v47, 23
    %v49 = vsub.s32 %v48, 127
    %v50 = vand.u32 2147483647, %v42
    %v51 = vand.u32 %v50, 8388607
    %v52 = vor.u32 %v51, 8388608
    %v53 = vsub.s32 0, %v52
    %v54 = vadd.s32 %v49, 1
    %vm55 = vcmp.gt.s32.totalorder %v54, 0
    %v56 = vsel %vm55, %v54, 0
    %v57 = vshrl.u32 %v56, 5
    %v58 = vand.u32 %v56, 31
    %v59 = vsub.s32 32, %v58
    %v60 = vshrl.u32 683565275, %v59
    %v61 = vshll.u32 683565275, %v58
    %v62 = vshrl.u32 2475754826, %v59
    %v63 = vor.u32 %v61, %v62
    %v64 = vshll.u32 2475754826, %v58
    %v65 = vshrl.u32 2131351028, %v59
    %v66 = vor.u32 %v64, %v65
    %v67 = vshll.u32 2131351028, %v58
    %v68 = vshrl.u32 2102212464, %v59
    %v69 = vor.u32 %v67, %v68
    %v70 = vshll.u32 2102212464, %v58
    %v71 = vshrl.u32 920167782, %v59
    %v72 = vor.u32 %v70, %v71
    %v73 = vshll.u32 920167782, %v58
    %v74 = vshrl.u32 1326507024, %v59
    %v75 = vor.u32 %v73, %v74
    %vm76 = vcmp.lt.s32.totalorder %v57, 1
    %vm77 = vcmp.lt.s32.totalorder %v57, 2
    %vm78 = vcmp.lt.s32.totalorder %v57, 3
    %vm79 = vcmp.lt.s32.totalorder %v57, 4
    %v80 = vsel %vm76, %v60, %v63
    %v81 = vsel %vm79, %v69, 2102212464
    %v82 = vsel %vm78, %v66, %v81
    %v83 = vsel %vm77, %v80, %v82
    %v84 = vsel %vm76, %v63, %v66
    %v85 = vsel %vm79, %v72, 920167782
    %v86 = vsel %vm78, %v69, %v85
    %v87 = vsel %vm77, %v84, %v86
    %v88 = vsel %vm76, %v66, %v69
    %v89 = vsel %vm79, %v75, 1326507024
    %v90 = vsel %vm78, %v72, %v89
    %v91 = vsel %vm77, %v88, %v90
    %v92 = vshll.u32 %v52, 8
    %v93 = vmul.u32.u64.compose %v92, %v91
    %v94 = vextract.low.u32 %v93
    %v95 = vextract.high.u32 %v93
    %v96 = vmul.u32.u64.compose %v92, %v87
    %v97 = vextract.low.u32 %v96
    %v98 = vextract.high.u32 %v96
    %v99 = vmul.u32 %v92, %v83
    %v100 = vadd.s32 %v95, %v97
    %vm101 = vc.u32 %v95, %v97
    %v102 = vadd.s32 %v98, 1
    %v103 = vsel %vm101, %v102, %v98
    %v104 = vadd.s32 %v99, %v103
    %v105 = vadd.s32 %v104, 536870912
    %v106 = vshrl.u32 %v105, 30
    %v107 = vshll.u32 %v106, 30
    %v108 = vsub.s32 %v104, %v107
    %vm109 = vcmp.lt.s32.totalorder %v108, 0
    %v110 = vsub.s32 0, %v108
    %v111 = vsel %vm109, %v110, %v108
    %v112 = vclz %v111
    %v113 = vsub.s32 %v112, 2
    %vm114 = vcmp.gt.s32.totalorder 0, %v113
    %v115 = vsel %vm114, 0, %v113
    %v116 = vsub.s32 32, %v115
    %v117 = vshll.u32 %v108, %v115
    %v118 = vshrl.u32 %v100, %v116
    %v119 = vor.u32 %v117, %v118
    %v120 = vsub.s32 4294967266, %v115
    %v121 = vadd.s32 %v120, 127
    %v122 = vshll.u32 %v121, 23
    %v123 = vor.u32 4788187, %v122
    %v124 = vand.u32 2147483647, %v123
    %v126 = vcvt.s32.f32 %v119
    %v127 = vmul.f32 %v126, %v124
    %v128 = vxor.u32 %v127, 2147483648
    %v129 = vsel %vm46, %v128, %v127
    %v130 = vsub.s32 4, %v106
    %v131 = vsel %vm46, %v130, %v106
    %v132 = vsel %vm45, %v42, %v129
    %v133 = vsel %vm45, 0, %v131
    %v134 = vcosq.f32.pop %v132
    %v135 = vsinq.f32.pop %v132
    %vm136 = vweird.f32 %v42
    %v137 = vadd.s32 %v133, 3
    %v138 = vand.u32 %v137, 3
    %vm139 = vcmp.lt.s32.totalorder %v138, 2
    %vm140 = vcmp.eq.s32.totalorder %v138, 0
    %v141 = vxor.u32 %v135, 2147483648
    %v142 = vsel %vm140, %v134, %v141
    %vm143 = vcmp.eq.s32.totalorder %v138, 2
    %v144 = vxor.u32 %v134, 2147483648
    %v145 = vsel %vm143, %v144, %v135
    %v146 = vsel %vm139, %v142, %v145
    %v147 = vsel %vm136, nan, %v146
    %v148 = vand.u32 2147483647, %v43
    %vm149 = vcmp.le.f32.partialorder %v148, 0.7853982
    %vm150 = vcmp.lt.s32.totalorder %v43, 0
    %v151 = vand.u32 %v43, 2139095040
    %v152 = vshrl.u32 %v151, 23
    %v153 = vsub.s32 %v152, 127
    %v154 = vand.u32 2147483647, %v43
    %v155 = vand.u32 %v154, 8388607
    %v156 = vor.u32 %v155, 8388608
    %v157 = vsub.s32 0, %v156
    %v158 = vadd.s32 %v153, 1
    %vm159 = vcmp.gt.s32.totalorder %v158, 0
    %v160 = vsel %vm159, %v158, 0
    %v161 = vshrl.u32 %v160, 5
    %v162 = vand.u32 %v160, 31
    %v163 = vsub.s32 32, %v162
    %v164 = vshrl.u32 683565275, %v163
    %v165 = vshll.u32 683565275, %v162
    %v166 = vshrl.u32 2475754826, %v163
    %v167 = vor.u32 %v165, %v166
    %v168 = vshll.u32 2475754826, %v162
    %v169 = vshrl.u32 2131351028, %v163
    %v170 = vor.u32 %v168, %v169
    %v171 = vshll.u32 2131351028, %v162
    %v172 = vshrl.u32 2102212464, %v163
    %v173 = vor.u32 %v171, %v172
    %v174 = vshll.u32 2102212464, %v162
    %v175 = vshrl.u32 920167782, %v163
    %v176 = vor.u32 %v174, %v175
    %v177 = vshll.u32 920167782, %v162
    %v178 = vshrl.u32 1326507024, %v163
    %v179 = vor.u32 %v177, %v178
    %vm180 = vcmp.lt.s32.totalorder %v161, 1
    %vm181 = vcmp.lt.s32.totalorder %v161, 2
    %vm182 = vcmp.lt.s32.totalorder %v161, 3
    %vm183 = vcmp.lt.s32.totalorder %v161, 4
    %v184 = vsel %vm180, %v164, %v167
    %v185 = vsel %vm183, %v173, 2102212464
    %v186 = vsel %vm182, %v170, %v185
    %v187 = vsel %vm181, %v184, %v186
    %v188 = vsel %vm180, %v167, %v170
    %v189 = vsel %vm183, %v176, 920167782
    %v190 = vsel %vm182, %v173, %v189
    %v191 = vsel %vm181, %v188, %v190
    %v192 = vsel %vm180, %v170, %v173
    %v193 = vsel %vm183, %v179, 1326507024
    %v194 = vsel %vm182, %v176, %v193
    %v195 = vsel %vm181, %v192, %v194
    %v196 = vshll.u32 %v156, 8
    %v197 = vmul.u32.u64.compose %v196, %v195
    %v198 = vextract.low.u32 %v197
    %v199 = vextract.high.u32 %v197
    %v200 = vmul.u32.u64.compose %v196, %v191
    %v201 = vextract.low.u32 %v200
    %v202 = vextract.high.u32 %v200
    %v203 = vmul.u32 %v196, %v187
    %v204 = vadd.s32 %v199, %v201
    %vm205 = vc.u32 %v199, %v201
    %v206 = vadd.s32 %v202, 1
    %v207 = vsel %vm205, %v206, %v202
    %v208 = vadd.s32 %v203, %v207
    %v209 = vadd.s32 %v208, 536870912
    %v210 = vshrl.u32 %v209, 30
    %v211 = vshll.u32 %v210, 30
    %v212 = vsub.s32 %v208, %v211
    %vm213 = vcmp.lt.s32.totalorder %v212, 0
    %v214 = vsub.s32 0, %v212
    %v215 = vsel %vm213, %v214, %v212
    %v216 = vclz %v215
    %v217 = vsub.s32 %v216, 2
    %vm218 = vcmp.gt.s32.totalorder 0, %v217
    %v219 = vsel %vm218, 0, %v217
    %v220 = vsub.s32 32, %v219
    %v221 = vshll.u32 %v212, %v219
    %v222 = vshrl.u32 %v204, %v220
    %v223 = vor.u32 %v221, %v222
    %v224 = vsub.s32 4294967266, %v219
    %v225 = vadd.s32 %v224, 127
    %v226 = vshll.u32 %v225, 23
    %v227 = vor.u32 4788187, %v226
    %v228 = vand.u32 2147483647, %v227
    %v230 = vcvt.s32.f32 %v223
    %v231 = vmul.f32 %v230, %v228
    %v232 = vxor.u32 %v231, 2147483648
    %v233 = vsel %vm150, %v232, %v231
    %v234 = vsub.s32 4, %v210
    %v235 = vsel %vm150, %v234, %v210
    %v236 = vsel %vm149, %v43, %v233
    %v237 = vsel %vm149, 0, %v235
    %v238 = vcosq.f32.pop %v236
    %v239 = vsinq.f32.pop %v236
    %vm240 = vweird.f32 %v43
    %v241 = vadd.s32 %v237, 3
    %v242 = vand.u32 %v241, 3
    %vm243 = vcmp.lt.s32.totalorder %v242, 2
    %vm244 = vcmp.eq.s32.totalorder %v242, 0
    %v245 = vxor.u32 %v239, 2147483648
    %v246 = vsel %vm244, %v238, %v245
    %vm247 = vcmp.eq.s32.totalorder %v242, 2
    %v248 = vxor.u32 %v238, 2147483648
    %v249 = vsel %vm247, %v248, %v239
    %v250 = vsel %vm243, %v246, %v249
    %v251 = vsel %vm240, nan, %v250
    %v252 = vstv %s37
    %v253 = vmul.f32 %v252, %v147
    %v254 = vmul.f32 %v252, %v251
    %255 = vst [vmem:[#allocation7] sm:$0xff] %v253
    %256 = vst [vmem:[#allocation7 + $0x8] sm:$0xff] %v254
    // Predicated region
    $region18: #{tpu_custom_call.1} parent=1 // pred_check
      _
    $region19: #{tpu_custom_call.1} parent=1 // pred_check_branch
      %258 = sbr.rel (0) target = $region21
    $region20: #{tpu_custom_call.1} parent=1 // pred_region
      %s260 = ssub.s32 256, 256
      %261 = vsyncadd [#allocation4], %s260
      %s262 = sshll.u32 [#allocation7], 4
      %s263 = int_to_ptr.vmem [resolvable:$true] %s262
      %268 = dma.vmem_to_hbm [thread:$0]  %s263, 256, %s2, [#allocation4], 128, 128, 8
    $region21: #{tpu_custom_call.1} parent=1 // pred_fallthru
      _
    // Predicated region
    $region22: #{tpu_custom_call.1} parent=1 // pred_check
      _
    $region23: #{tpu_custom_call.1} parent=1 // pred_check_branch
      %270 = sbr.rel (0) target = $region25
    $region24: #{tpu_custom_call.1} parent=1 // pred_region
      %271 = dma.done [#allocation4], 256
    $region25: #{tpu_custom_call.1} parent=1 // pred_fallthru
      _
    %272 = vsyncpa [#allocation3], 1
    %273 = vsyncpa [#allocation4], 1
    %274 = vsyncpa [#allocation5], 1

</llo_original>
